<compile_context>
chip_gen: v7x
topology: tpu7x:2x2x1
jax: 0.10.0
libtpu: 0.0.40
codegen_flags: <defaults>
</compile_context>

<pallas_src>
import jax
import jax.numpy as jnp
from jax.experimental import pallas as pl
from jax.experimental.pallas import tpu as pltpu

HIDDEN = 128
LANE = 128


def _round_up(x, m):
    return (x + m - 1) // m * m


# ---------------------------------------------------------------------------
# Kernel
# ---------------------------------------------------------------------------
def dqn_kernel(x_ref, w1_ref, b1_ref, w2_ref, b2_ref, w3_ref, b3_ref, o_ref):
    """One batch tile of the fused 3-layer MLP.

    x_ref : (TB, SDIM)        f32   (pipelined per grid step, unpadded)
    w1_ref: (SDIM, 128)       bf16  (resident: index_map -> (0, 0))
    w2_ref: (128, 128)        bf16  (resident)
    w3_ref: (128, A_PAD)      bf16  (resident; lane-padded in VMEM only)
    b*_ref: (1, out)          f32
    o_ref : (TB, ADIM)        f32   (narrow HBM-facing store)
    """
    adim = o_ref.shape[-1]

    # Cast the input to the MXU compute dtype inside the kernel (input stays
    # f32/unpadded in HBM).
    x = x_ref[...].astype(w1_ref.dtype)

    # Layer 1: (TB, SDIM) @ (SDIM, 128) -> f32 acc, bias + tanh in f32.
    h1 = jnp.tanh(
        jnp.dot(x, w1_ref[...], preferred_element_type=jnp.float32) + b1_ref[...]
    ).astype(w2_ref.dtype)

    # Layer 2: (TB, 128) @ (128, 128)
    h2 = jnp.tanh(
        jnp.dot(h1, w2_ref[...], preferred_element_type=jnp.float32) + b2_ref[...]
    ).astype(w3_ref.dtype)

    # Layer 3 (Q-values): (TB, 128) @ (128, A_PAD); only the first adim
    # columns go back to HBM.
    out = jnp.dot(h2, w3_ref[...], preferred_element_type=jnp.float32) + b3_ref[...]
    o_ref[...] = out[:, :adim].astype(o_ref.dtype)


# ---------------------------------------------------------------------------
# Parameter setup (one-time glue: transpose / pad / cast)
# ---------------------------------------------------------------------------
def init_dqn_params(key, sdim, adim):
    """Raw f32 params, stored [in, out] (== PyTorch weight.T), biases [out]."""
    ks = jax.random.split(key, 6)
    w1 = jax.random.normal(ks[0], (sdim, HIDDEN), jnp.float32) * 0.1
    b1 = jax.random.normal(ks[1], (HIDDEN,), jnp.float32) * 0.1
    w2 = jax.random.normal(ks[2], (HIDDEN, HIDDEN), jnp.float32) * 0.1
    b2 = jax.random.normal(ks[3], (HIDDEN,), jnp.float32) * 0.1
    w3 = jax.random.normal(ks[4], (HIDDEN, adim), jnp.float32) * 0.1
    b3 = jax.random.normal(ks[5], (adim,), jnp.float32) * 0.1
    return dict(w1=w1, b1=b1, w2=w2, b2=b2, w3=w3, b3=b3)


def pack_params(raw, compute_dtype=jnp.bfloat16):
    """Cast weights to bf16; pad only the (VMEM-resident) last layer to lanes."""
    sdim = raw["w1"].shape[0]
    adim = raw["w3"].shape[1]
    a_pad = _round_up(adim, LANE)

    w1 = raw["w1"].astype(compute_dtype)            # (sdim, 128) — no padding
    w2 = raw["w2"].astype(compute_dtype)            # (128, 128)
    w3 = jnp.zeros((HIDDEN, a_pad), compute_dtype)
    w3 = w3.at[:, :adim].set(raw["w3"].astype(compute_dtype))

    b1 = raw["b1"].reshape(1, HIDDEN).astype(jnp.float32)
    b2 = raw["b2"].reshape(1, HIDDEN).astype(jnp.float32)
    b3 = jnp.zeros((1, a_pad), jnp.float32)
    b3 = b3.at[:, :adim].set(raw["b3"].reshape(1, adim).astype(jnp.float32))

    return dict(
        w1=w1, b1=b1, w2=w2, b2=b2, w3=w3, b3=b3,
        sdim=sdim, adim=adim, a_pad=a_pad, compute_dtype=compute_dtype,
    )


# ---------------------------------------------------------------------------
# Wrapper
# ---------------------------------------------------------------------------
def dqn_forward(x, packed, tb=None):
    """x: [batch, sdim] float32 -> Q-values [batch, adim] float32."""
    batch, sdim = x.shape
    assert sdim == packed["sdim"], "feature dim mismatch"
    adim = packed["adim"]
    a_pad = packed["a_pad"]

    # Tile selection:
    #   * tiny (acting-loop) batches: one 16-sublane tile (native bf16 height).
    #   * training batches: large tiles (amortize ~0.35 us/step overhead),
    #     capped at ceil(batch/2) so grid >= 2 and both v7x TCs participate.
    if tb is None:
        if batch <= 16:
            tb = _round_up(batch, 16)
        else:
            tb = min(2048, _round_up(pl.cdiv(batch, 2), 16))
    batch_p = _round_up(batch, tb)

    # Only pad the batch axis (rows); keep x f32 and feature-dim unpadded.
    x_p = jnp.pad(x, ((0, batch_p - batch), (0, 0))) if batch_p != batch else x

    grid = (batch_p // tb,)

    out = pl.pallas_call(
        dqn_kernel,
        out_shape=jax.ShapeDtypeStruct((batch_p, adim), jnp.float32),
        grid_spec=pltpu.PrefetchScalarGridSpec(
            num_scalar_prefetch=0,
            grid=grid,
            in_specs=[
                # Pipelined per-tile input (last dim == full array dim).
                pl.BlockSpec((tb, sdim), lambda i: (i, 0)),
                # Weights / biases: full arrays, resident across grid steps.
                pl.BlockSpec((sdim, HIDDEN), lambda i: (0, 0)),
                pl.BlockSpec((1, HIDDEN), lambda i: (0, 0)),
                pl.BlockSpec((HIDDEN, HIDDEN), lambda i: (0, 0)),
                pl.BlockSpec((1, HIDDEN), lambda i: (0, 0)),
                pl.BlockSpec((HIDDEN, a_pad), lambda i: (0, 0)),
                pl.BlockSpec((1, a_pad), lambda i: (0, 0)),
            ],
            # Narrow HBM-facing output: (tb, adim), adim == full array dim.
            out_specs=pl.BlockSpec((tb, adim), lambda i: (i, 0)),
        ),
        compiler_params=pltpu.CompilerParams(
            dimension_semantics=("parallel",),
        ),
    )(
        x_p,
        packed["w1"], packed["b1"],
        packed["w2"], packed["b2"],
        packed["w3"], packed["b3"],
    )

    # Strip batch padding only (no action-dim padding in HBM anymore).
    return out[:batch] if batch_p != batch else out


# ---------------------------------------------------------------------------
# Pure-JAX f32 reference (matches the PyTorch module semantics)
# ---------------------------------------------------------------------------
def dqn_reference(x, raw):
    h1 = jnp.tanh(x @ raw["w1"] + raw["b1"])
    h2 = jnp.tanh(h1 @ raw["w2"] + raw["b2"])
    return h2 @ raw["w3"] + raw["b3"]


if __name__ == "__main__":
    # Flappy-bird-ish DQN: small state vector, 2 actions (flap / no-op).
    batch, sdim, adim = 4, 8, 2

    key = jax.random.PRNGKey(0)
    k_x, k_p = jax.random.split(key)
    x = jax.random.normal(k_x, (batch, sdim), jnp.float32)

    raw_params = init_dqn_params(k_p, sdim, adim)
    packed_params = pack_params(raw_params)

    out = jax.block_until_ready(dqn_forward(x, packed_params))

    ref = dqn_reference(x, raw_params)
    assert out.shape == (batch, adim)
    # bf16 MXU inputs (f32 accumulation) vs. the pure-f32 reference.
    assert jnp.allclose(out, ref, atol=2e-2, rtol=2e-2), (
        f"max abs err = {jnp.max(jnp.abs(out - ref))}"
    )

    # Also exercise a training-size batch path (grid >= 2, large tiles).
    xb = jax.random.normal(k_x, (4096, sdim), jnp.float32)
    outb = jax.block_until_ready(dqn_forward(xb, packed_params))
    refb = dqn_reference(xb, raw_params)
    assert outb.shape == (4096, adim)
    assert jnp.allclose(outb, refb, atol=2e-2, rtol=2e-2), (
        f"max abs err (batched) = {jnp.max(jnp.abs(outb - refb))}"
    )

    print("KERNEL_OK")
</pallas_src>

<mosaic_0001>
module attributes {stable_mosaic.version = 11 : i64} {
  func.func @dqn_kernel(%arg0: i32, %arg1: memref<16x8xf32, #tpu.memory_space<vmem>>, %arg2: memref<8x128xbf16, #tpu.memory_space<vmem>>, %arg3: memref<1x128xf32, #tpu.memory_space<vmem>>, %arg4: memref<128x128xbf16, #tpu.memory_space<vmem>>, %arg5: memref<1x128xf32, #tpu.memory_space<vmem>>, %arg6: memref<128x128xbf16, #tpu.memory_space<vmem>>, %arg7: memref<1x128xf32, #tpu.memory_space<vmem>>, %arg8: memref<16x2xf32, #tpu.memory_space<vmem>>) attributes {dimension_semantics = [#tpu.dimension_semantics<parallel>], iteration_bounds = array<i64: 1>, scalar_prefetch = 0 : i64, scratch_operands = 0 : i64, tpu.core_type = #tpu.core_type<tc>, window_params = [{transform_indices = @transform_0, window_bounds = array<i64: 16, 8>}, {pipeline_mode = #tpu.pipeline_mode<synchronous>, transform_indices = @transform_1, window_bounds = array<i64: 8, 128>}, {pipeline_mode = #tpu.pipeline_mode<synchronous>, transform_indices = @transform_2, window_bounds = array<i64: 1, 128>}, {pipeline_mode = #tpu.pipeline_mode<synchronous>, transform_indices = @transform_3, window_bounds = array<i64: 128, 128>}, {pipeline_mode = #tpu.pipeline_mode<synchronous>, transform_indices = @transform_4, window_bounds = array<i64: 1, 128>}, {pipeline_mode = #tpu.pipeline_mode<synchronous>, transform_indices = @transform_5, window_bounds = array<i64: 128, 128>}, {pipeline_mode = #tpu.pipeline_mode<synchronous>, transform_indices = @transform_6, window_bounds = array<i64: 1, 128>}, {transform_indices = @transform_7, window_bounds = array<i64: 16, 2>}]} {
    %c0 = arith.constant 0 : index
    %c0_0 = arith.constant 0 : index
    %0 = vector.load %arg1[%c0, %c0_0] : memref<16x8xf32, #tpu.memory_space<vmem>>, vector<16x8xf32>
    %1 = arith.truncf %0 : vector<16x8xf32> to vector<16x8xbf16>
    %c0_1 = arith.constant 0 : index
    %c0_2 = arith.constant 0 : index
    %2 = vector.load %arg2[%c0_1, %c0_2] : memref<8x128xbf16, #tpu.memory_space<vmem>>, vector<8x128xbf16>
    %cst = arith.constant dense<0.000000e+00> : vector<16x128xf32>
    %3 = tpu.matmul %1, %2, %cst {dimension_numbers = #tpu.dot_dimension_numbers<[1], [0], [0], [1], [0, 0, 1, 1], [], []>} : vector<16x8xbf16>, vector<8x128xbf16>, vector<16x128xf32> -> vector<16x128xf32>
    %c0_3 = arith.constant 0 : index
    %c0_4 = arith.constant 0 : index
    %4 = vector.load %arg3[%c0_3, %c0_4] : memref<1x128xf32, #tpu.memory_space<vmem>>, vector<1x128xf32>
    %5 = vector.broadcast %4 : vector<1x128xf32> to vector<16x128xf32>
    %6 = arith.addf %3, %5 : vector<16x128xf32>
    %7 = math.tanh %6 : vector<16x128xf32>
    %8 = arith.truncf %7 : vector<16x128xf32> to vector<16x128xbf16>
    %c0_5 = arith.constant 0 : index
    %c0_6 = arith.constant 0 : index
    %9 = vector.load %arg4[%c0_5, %c0_6] : memref<128x128xbf16, #tpu.memory_space<vmem>>, vector<128x128xbf16>
    %cst_7 = arith.constant dense<0.000000e+00> : vector<16x128xf32>
    %10 = tpu.matmul %8, %9, %cst_7 {dimension_numbers = #tpu.dot_dimension_numbers<[1], [0], [0], [1], [0, 0, 1, 1], [], []>} : vector<16x128xbf16>, vector<128x128xbf16>, vector<16x128xf32> -> vector<16x128xf32>
    %c0_8 = arith.constant 0 : index
    %c0_9 = arith.constant 0 : index
    %11 = vector.load %arg5[%c0_8, %c0_9] : memref<1x128xf32, #tpu.memory_space<vmem>>, vector<1x128xf32>
    %12 = vector.broadcast %11 : vector<1x128xf32> to vector<16x128xf32>
    %13 = arith.addf %10, %12 : vector<16x128xf32>
    %14 = math.tanh %13 : vector<16x128xf32>
    %15 = arith.truncf %14 : vector<16x128xf32> to vector<16x128xbf16>
    %c0_10 = arith.constant 0 : index
    %c0_11 = arith.constant 0 : index
    %16 = vector.load %arg6[%c0_10, %c0_11] : memref<128x128xbf16, #tpu.memory_space<vmem>>, vector<128x128xbf16>
    %cst_12 = arith.constant dense<0.000000e+00> : vector<16x128xf32>
    %17 = tpu.matmul %15, %16, %cst_12 {dimension_numbers = #tpu.dot_dimension_numbers<[1], [0], [0], [1], [0, 0, 1, 1], [], []>} : vector<16x128xbf16>, vector<128x128xbf16>, vector<16x128xf32> -> vector<16x128xf32>
    %c0_13 = arith.constant 0 : index
    %c0_14 = arith.constant 0 : index
    %18 = vector.load %arg7[%c0_13, %c0_14] : memref<1x128xf32, #tpu.memory_space<vmem>>, vector<1x128xf32>
    %19 = vector.broadcast %18 : vector<1x128xf32> to vector<16x128xf32>
    %20 = arith.addf %17, %19 : vector<16x128xf32>
    %21 = vector.extract_strided_slice %20 {offsets = [0, 0], sizes = [16, 2], strides = [1, 1]} : vector<16x128xf32> to vector<16x2xf32>
    %c0_15 = arith.constant 0 : index
    %c0_16 = arith.constant 0 : index
    %22 = vector.load %arg8[%c0_15, %c0_16] : memref<16x2xf32, #tpu.memory_space<vmem>>, vector<16x2xf32>
    tpu.vector_store %arg8[%c0_15, %c0_16], %21 {strides = array<i32>} : memref<16x2xf32, #tpu.memory_space<vmem>>, vector<16x2xf32>,
    return
  }
  func.func @transform_0(%arg0: i32) -> (i32, i32) {
    %c0_i32 = arith.constant 0 : i32
    %c0_i32_0 = arith.constant 0 : i32
    return %arg0, %c0_i32 : i32, i32
  }
  func.func @transform_1(%arg0: i32) -> (i32, i32) {
    %c0_i32 = arith.constant 0 : i32
    %c0_i32_0 = arith.constant 0 : i32
    %c0_i32_1 = arith.constant 0 : i32
    return %c0_i32, %c0_i32_0 : i32, i32
  }
  func.func @transform_2(%arg0: i32) -> (i32, i32) {
    %c0_i32 = arith.constant 0 : i32
    %c0_i32_0 = arith.constant 0 : i32
    %c0_i32_1 = arith.constant 0 : i32
    return %c0_i32, %c0_i32_0 : i32, i32
  }
  func.func @transform_3(%arg0: i32) -> (i32, i32) {
    %c0_i32 = arith.constant 0 : i32
    %c0_i32_0 = arith.constant 0 : i32
    %c0_i32_1 = arith.constant 0 : i32
    return %c0_i32, %c0_i32_0 : i32, i32
  }
  func.func @transform_4(%arg0: i32) -> (i32, i32) {
    %c0_i32 = arith.constant 0 : i32
    %c0_i32_0 = arith.constant 0 : i32
    %c0_i32_1 = arith.constant 0 : i32
    return %c0_i32, %c0_i32_0 : i32, i32
  }
  func.func @transform_5(%arg0: i32) -> (i32, i32) {
    %c0_i32 = arith.constant 0 : i32
    %c0_i32_0 = arith.constant 0 : i32
    %c0_i32_1 = arith.constant 0 : i32
    return %c0_i32, %c0_i32_0 : i32, i32
  }
  func.func @transform_6(%arg0: i32) -> (i32, i32) {
    %c0_i32 = arith.constant 0 : i32
    %c0_i32_0 = arith.constant 0 : i32
    %c0_i32_1 = arith.constant 0 : i32
    return %c0_i32, %c0_i32_0 : i32, i32
  }
  func.func @transform_7(%arg0: i32) -> (i32, i32) {
    %c0_i32 = arith.constant 0 : i32
    %c0_i32_0 = arith.constant 0 : i32
    return %arg0, %c0_i32 : i32, i32
  }
}

</mosaic_0001>

<llo_original>
// kernel: tpu_custom_call.1
$region0: #{tpu_custom_call.1}
  #allocation0 [shape = 'u32[]', space=smem, size = 0x4, offset = 0x4, fixed_abs, tag = 'smem constant byte address 0x4 - core index']
  #allocation1 [shape = 'u32[144,128]{1,0:T(1,128)}', space=vmem, size = 0x12000, scoped, tag = 'internal scratch']
  %s0 = inlined_call_operand.vmem [shape: f32[16,8], index: 0, kind: input, shape index: {}]
  %s1 = inlined_call_operand.vmem [shape: bf16[8,128], index: 1, kind: input, shape index: {}]
  %s2 = inlined_call_operand.vmem [shape: f32[1,128], index: 2, kind: input, shape index: {}]
  %s3 = inlined_call_operand.hbm [shape: bf16[128,128], index: 3, kind: input, shape index: {}]
  %s4 = inlined_call_operand.vmem [shape: f32[1,128], index: 4, kind: input, shape index: {}]
  %s5 = inlined_call_operand.hbm [shape: bf16[128,128], index: 5, kind: input, shape index: {}]
  %s6 = inlined_call_operand.vmem [shape: f32[1,128], index: 6, kind: input, shape index: {}]
  %s7 = inlined_call_operand.vmem [shape: f32[16,2], index: 7, kind: output, shape index: {}]
  %s8 = sld [smem:[#allocation0]]
  $region46: #{tpu_custom_call.1} parent=0
    _
  %s10 = ssub.s32 1, %s8
  %s11 = scalar_select 0, %s10, %s8
  $region1: #{tpu_custom_call.1} parent=0
    #allocation2 [shape = 'u8[32768]{0}', space=vmem, size = 0x8000, scoped, tag = 'input window, operand 3, single buffered']
    #allocation3 [shape = 's32[1]{0}', space=sflag, size = 0x4, scoped, tag = 'scoped memory for tpu_custom_call.1']
    #allocation4 [shape = 'u8[32768]{0}', space=vmem, size = 0x8000, scoped, tag = 'input window, operand 5, single buffered']
    #allocation5 [shape = 's32[1]{0}', space=sflag, size = 0x4, scoped, tag = 'scoped memory for tpu_custom_call.1']
    %12 = vsyncpa [#allocation3], 0
    %13 = vsyncpa [#allocation5], 0
    // Predicated region
    $region2: #{tpu_custom_call.1} parent=1 // pred_check
      _
    $region3: #{tpu_custom_call.1} parent=1 // pred_check_branch
      %15 = sbr.rel (0) target = $region5
    $region4: #{tpu_custom_call.1} parent=1 // pred_region
      _
    $region5: #{tpu_custom_call.1} parent=1 // pred_fallthru
      _
    // Predicated region
    $region6: #{tpu_custom_call.1} parent=1 // pred_check
      _
    $region7: #{tpu_custom_call.1} parent=1 // pred_check_branch
      %17 = sbr.rel (0) target = $region9
    $region8: #{tpu_custom_call.1} parent=1 // pred_region
      _
    $region9: #{tpu_custom_call.1} parent=1 // pred_fallthru
      _
    // Predicated region
    $region10: #{tpu_custom_call.1} parent=1 // pred_check
      _
    $region11: #{tpu_custom_call.1} parent=1 // pred_check_branch
      %19 = sbr.rel (0) target = $region13
    $region12: #{tpu_custom_call.1} parent=1 // pred_region
      _
    $region13: #{tpu_custom_call.1} parent=1 // pred_fallthru
      _
    // Predicated region
    $region14: #{tpu_custom_call.1} parent=1 // pred_check
      _
    $region15: #{tpu_custom_call.1} parent=1 // pred_check_branch
      %21 = sbr.rel (0) target = $region17
    $region16: #{tpu_custom_call.1} parent=1 // pred_region
      %s23 = ssub.s32 1024, 1024
      %24 = vsyncadd [#allocation3], %s23
      %s25 = sshll.u32 [#allocation2], 4
      %s26 = int_to_ptr.vmem [resolvable:$true] %s25
      %31 = dma.hbm_to_vmem [thread:$0]  %s3, 1024, %s26, [#allocation3], 64, 64, 4
    $region17: #{tpu_custom_call.1} parent=1 // pred_fallthru
      _
    // Predicated region
    $region18: #{tpu_custom_call.1} parent=1 // pred_check
      _
    $region19: #{tpu_custom_call.1} parent=1 // pred_check_branch
      %33 = sbr.rel (0) target = $region21
    $region20: #{tpu_custom_call.1} parent=1 // pred_region
      _
    $region21: #{tpu_custom_call.1} parent=1 // pred_fallthru
      _
    // Predicated region
    $region22: #{tpu_custom_call.1} parent=1 // pred_check
      _
    $region23: #{tpu_custom_call.1} parent=1 // pred_check_branch
      %35 = sbr.rel (0) target = $region25
    $region24: #{tpu_custom_call.1} parent=1 // pred_region
      %s37 = ssub.s32 1024, 1024
      %38 = vsyncadd [#allocation5], %s37
      %s39 = sshll.u32 [#allocation4], 4
      %s40 = int_to_ptr.vmem [resolvable:$true] %s39
      %45 = dma.hbm_to_vmem [thread:$0]  %s5, 1024, %s40, [#allocation5], 64, 64, 4
    $region25: #{tpu_custom_call.1} parent=1 // pred_fallthru
      _
    // Predicated region
    $region26: #{tpu_custom_call.1} parent=1 // pred_check
      _
    $region27: #{tpu_custom_call.1} parent=1 // pred_check_branch
      %47 = sbr.rel (0) target = $region29
    $region28: #{tpu_custom_call.1} parent=1 // pred_region
      _
    $region29: #{tpu_custom_call.1} parent=1 // pred_fallthru
      _
    // Predicated region
    $region30: #{tpu_custom_call.1} parent=1 // pred_check
      _
    $region31: #{tpu_custom_call.1} parent=1 // pred_check_branch
      %49 = sbr.rel (0) target = $region33
    $region32: #{tpu_custom_call.1} parent=1 // pred_region
      %50 = dma.done [#allocation3], 1024
    $region33: #{tpu_custom_call.1} parent=1 // pred_fallthru
      _
    // Predicated region
    $region34: #{tpu_custom_call.1} parent=1 // pred_check
      _
    $region35: #{tpu_custom_call.1} parent=1 // pred_check_branch
      %52 = sbr.rel (0) target = $region37
    $region36: #{tpu_custom_call.1} parent=1 // pred_region
      %53 = dma.done [#allocation5], 1024
    $region37: #{tpu_custom_call.1} parent=1 // pred_fallthru
      _
    %v55 = vld [vmem:[%s0] sm:$0xff]
    %v56 = vld [vmem:[%s0 + $0x8] sm:$0xff]
    %v57 = vpack.c.bf16 %v56, %v55
    %v58 = vld [vmem:[%s1] sm:$0xf]
    %v59 = vld [vmem:[%s2] sm:$0x1]
    %v61 = vlaneseq
    %v62 = vshrl.u32 %v61, 7
    %v63 = vsub.s32 0, %v62
    %v64 = vrot.slane %v59, %v63
    %vm66 = vcmask 64512
    %v68 = vsel %vm66, %v57, 0
    %vm70 = vcmask 1043456
    %v72 = vsel %vm70, %v58, 0
    %74 = vmatprep.subr.bf16.mxu0 0
    %75 = vmatpush1.bf16.msra.mxu0 %v72
    %76 = vmatprep.subr.bf16.mxu0 0
    %77 = vmatpush1.bf16.msra.mxu0 0
    %78 = vmatprep.subr.bf16.mxu0 0
    %79 = vmatpush1.bf16.msra.mxu0 0
    %80 = vmatprep.subr.bf16.mxu0 0
    %81 = vmatpush1.bf16.msra.mxu0 0
    %82 = vmatprep.subr.bf16.mxu0 0
    %83 = vmatpush1.bf16.msra.mxu0 0
    %84 = vmatprep.subr.bf16.mxu0 0
    %85 = vmatpush1.bf16.msra.mxu0 0
    %86 = vmatprep.subr.bf16.mxu0 0
    %87 = vmatpush1.bf16.msra.mxu0 0
    %88 = vmatprep.subr.bf16.mxu0 0
    %89 = vmatpush1.bf16.msra.mxu0 0
    %90 = vmatprep.subr.bf16.mxu0 0
    %91 = vmatpush1.bf16.msra.mxu0 0
    %92 = vmatprep.subr.bf16.mxu0 0
    %93 = vmatpush1.bf16.msra.mxu0 0
    %94 = vmatprep.subr.bf16.mxu0 0
    %95 = vmatpush1.bf16.msra.mxu0 0
    %96 = vmatprep.subr.bf16.mxu0 0
    %97 = vmatpush1.bf16.msra.mxu0 0
    %98 = vmatprep.subr.bf16.mxu0 0
    %99 = vmatpush1.bf16.msra.mxu0 0
    %100 = vmatprep.subr.bf16.mxu0 0
    %101 = vmatpush1.bf16.msra.mxu0 0
    %102 = vmatprep.subr.bf16.mxu0 0
    %103 = vmatpush1.bf16.msra.mxu0 0
    %104 = vmatprep.subr.bf16.mxu0 0
    %105 = vmatpush1.bf16.msra.mxu0 0
    %106 = vmatprep.mubr.bf16.mxu0 0
    %107 = vmatmul.mubr.bf16.gmra.mrb[0].mxu0 %v68
    %v108 = vpop.f32.mrb[0].mxu0
    %v109 = vadd.f32 %v64, %v108
    %v110 = vpop.f32.mrb[0].mxu0
    %v111 = vpop.f32.mrb[0].mxu0
    %v112 = vadd.f32 %v64, %v111
    %v113 = vpop.f32.mrb[0].mxu0
    %114 = vdwg.mxu0
    %v115 = vtanh.pop %v109
    %v116 = vtanh.pop %v112
    %v117 = vpack.c.bf16 %v116, %v115
    %v118 = vld [vmem:[#allocation2] sm:$0xf]
    %v119 = vld [vmem:[#allocation2 + $0x4] sm:$0xf]
    %v120 = vld [vmem:[#allocation2 + $0x8] sm:$0xf]
    %v121 = vld [vmem:[#allocation2 + $0xc] sm:$0xf]
    %v122 = vld [vmem:[#allocation2 + $0x10] sm:$0xf]
    %v123 = vld [vmem:[#allocation2 + $0x14] sm:$0xf]
    %v124 = vld [vmem:[#allocation2 + $0x18] sm:$0xf]
    %v125 = vld [vmem:[#allocation2 + $0x1c] sm:$0xf]
    %v126 = vld [vmem:[#allocation2 + $0x20] sm:$0xf]
    %v127 = vld [vmem:[#allocation2 + $0x24] sm:$0xf]
    %v128 = vld [vmem:[#allocation2 + $0x28] sm:$0xf]
    %v129 = vld [vmem:[#allocation2 + $0x2c] sm:$0xf]
    %v130 = vld [vmem:[#allocation2 + $0x30] sm:$0xf]
    %v131 = vld [vmem:[#allocation2 + $0x34] sm:$0xf]
    %v132 = vld [vmem:[#allocation2 + $0x38] sm:$0xf]
    %v133 = vld [vmem:[#allocation2 + $0x3c] sm:$0xf]
    %v134 = vld [vmem:[%s4] sm:$0x1]
    %v136 = vlaneseq
    %v137 = vshrl.u32 %v136, 7
    %v138 = vsub.s32 0, %v137
    %v139 = vrot.slane %v134, %v138
    %v157 = vunpack.c.l.b16 %v118
    %v158 = vunpack.c.l.b16 %v119
    %v159 = vunpack.c.l.b16 %v120
    %v160 = vunpack.c.l.b16 %v121
    %v161 = vunpack.c.l.b16 %v122
    %v162 = vunpack.c.l.b16 %v123
    %v163 = vunpack.c.l.b16 %v124
    %v164 = vunpack.c.l.b16 %v125
    %v165 = vunpack.c.l.b16 %v126
    %v166 = vunpack.c.l.b16 %v127
    %v167 = vunpack.c.l.b16 %v128
    %v168 = vunpack.c.l.b16 %v129
    %v169 = vunpack.c.l.b16 %v130
    %v170 = vunpack.c.l.b16 %v131
    %v171 = vunpack.c.l.b16 %v132
    %v172 = vunpack.c.l.b16 %v133
    %v173 = vpack.c.b16 %v158, %v157
    %v174 = vpack.c.b16 %v160, %v159
    %v175 = vpack.c.b16 %v162, %v161
    %v176 = vpack.c.b16 %v164, %v163
    %v177 = vpack.c.b16 %v166, %v165
    %v178 = vpack.c.b16 %v168, %v167
    %v179 = vpack.c.b16 %v170, %v169
    %v180 = vpack.c.b16 %v172, %v171
    %189 = vmatprep.subr.bf16.mxu0 0
    %190 = vmatpush1.bf16.msra.mxu0 %v173
    %191 = vmatprep.subr.bf16.mxu0 0
    %192 = vmatpush1.bf16.msra.mxu0 %v174
    %193 = vmatprep.subr.bf16.mxu0 0
    %194 = vmatpush1.bf16.msra.mxu0 %v175
    %195 = vmatprep.subr.bf16.mxu0 0
    %196 = vmatpush1.bf16.msra.mxu0 %v176
    %197 = vmatprep.subr.bf16.mxu0 0
    %198 = vmatpush1.bf16.msra.mxu0 %v177
    %199 = vmatprep.subr.bf16.mxu0 0
    %200 = vmatpush1.bf16.msra.mxu0 %v178
    %201 = vmatprep.subr.bf16.mxu0 0
    %202 = vmatpush1.bf16.msra.mxu0 %v179
    %203 = vmatprep.subr.bf16.mxu0 0
    %204 = vmatpush1.bf16.msra.mxu0 %v180
    %205 = vmatprep.subr.bf16.mxu0 0
    %206 = vmatpush1.bf16.msra.mxu0 0
    %207 = vmatprep.subr.bf16.mxu0 0
    %208 = vmatpush1.bf16.msra.mxu0 0
    %209 = vmatprep.subr.bf16.mxu0 0
    %210 = vmatpush1.bf16.msra.mxu0 0
    %211 = vmatprep.subr.bf16.mxu0 0
    %212 = vmatpush1.bf16.msra.mxu0 0
    %213 = vmatprep.subr.bf16.mxu0 0
    %214 = vmatpush1.bf16.msra.mxu0 0
    %215 = vmatprep.subr.bf16.mxu0 0
    %216 = vmatpush1.bf16.msra.mxu0 0
    %217 = vmatprep.subr.bf16.mxu0 0
    %218 = vmatpush1.bf16.msra.mxu0 0
    %219 = vmatprep.subr.bf16.mxu0 0
    %220 = vmatpush1.bf16.msra.mxu0 0
    %221 = vmatprep.mubr.bf16.mxu0 0
    %222 = vmatmul.mubr.bf16.gmra.mrb[0].mxu0 %v117
    %v223 = vpop.f32.mrb[0].mxu0
    %v224 = vadd.f32 %v139, %v223
    %v225 = vpop.f32.mrb[0].mxu0
    %v226 = vpop.f32.mrb[0].mxu0
    %v227 = vadd.f32 %v139, %v226
    %v228 = vpop.f32.mrb[0].mxu0
    %229 = vdwg.mxu0
    %v230 = vtanh.pop %v224
    %v231 = vtanh.pop %v227
    %v232 = vpack.c.bf16 %v231, %v230
    %v233 = vld [vmem:[#allocation4] sm:$0xf]
    %v234 = vld [vmem:[#allocation4 + $0x4] sm:$0xf]
    %v235 = vld [vmem:[#allocation4 + $0x8] sm:$0xf]
    %v236 = vld [vmem:[#allocation4 + $0xc] sm:$0xf]
    %v237 = vld [vmem:[#allocation4 + $0x10] sm:$0xf]
    %v238 = vld [vmem:[#allocation4 + $0x14] sm:$0xf]
    %v239 = vld [vmem:[#allocation4 + $0x18] sm:$0xf]
    %v240 = vld [vmem:[#allocation4 + $0x1c] sm:$0xf]
    %v241 = vld [vmem:[#allocation4 + $0x20] sm:$0xf]
    %v242 = vld [vmem:[#allocation4 + $0x24] sm:$0xf]
    %v243 = vld [vmem:[#allocation4 + $0x28] sm:$0xf]
    %v244 = vld [vmem:[#allocation4 + $0x2c] sm:$0xf]
    %v245 = vld [vmem:[#allocation4 + $0x30] sm:$0xf]
    %v246 = vld [vmem:[#allocation4 + $0x34] sm:$0xf]
    %v247 = vld [vmem:[#allocation4 + $0x38] sm:$0xf]
    %v248 = vld [vmem:[#allocation4 + $0x3c] sm:$0xf]
    %v249 = vld [vmem:[%s6] sm:$0x1]
    %v251 = vlaneseq
    %v252 = vshrl.u32 %v251, 7
    %v253 = vsub.s32 0, %v252
    %v254 = vrot.slane %v249, %v253
    %v272 = vunpack.c.l.b16 %v233
    %v273 = vunpack.c.l.b16 %v234
    %v274 = vunpack.c.l.b16 %v235
    %v275 = vunpack.c.l.b16 %v236
    %v276 = vunpack.c.l.b16 %v237
    %v277 = vunpack.c.l.b16 %v238
    %v278 = vunpack.c.l.b16 %v239
    %v279 = vunpack.c.l.b16 %v240
    %v280 = vunpack.c.l.b16 %v241
    %v281 = vunpack.c.l.b16 %v242
    %v282 = vunpack.c.l.b16 %v243
    %v283 = vunpack.c.l.b16 %v244
    %v284 = vunpack.c.l.b16 %v245
    %v285 = vunpack.c.l.b16 %v246
    %v286 = vunpack.c.l.b16 %v247
    %v287 = vunpack.c.l.b16 %v248
    %v288 = vpack.c.b16 %v273, %v272
    %v289 = vpack.c.b16 %v275, %v274
    %v290 = vpack.c.b16 %v277, %v276
    %v291 = vpack.c.b16 %v279, %v278
    %v292 = vpack.c.b16 %v281, %v280
    %v293 = vpack.c.b16 %v283, %v282
    %v294 = vpack.c.b16 %v285, %v284
    %v295 = vpack.c.b16 %v287, %v286
    %304 = vmatprep.subr.bf16.mxu0 0
    %305 = vmatpush1.bf16.msra.mxu0 %v288
    %306 = vmatprep.subr.bf16.mxu0 0
    %307 = vmatpush1.bf16.msra.mxu0 %v289
    %308 = vmatprep.subr.bf16.mxu0 0
    %309 = vmatpush1.bf16.msra.mxu0 %v290
    %310 = vmatprep.subr.bf16.mxu0 0
    %311 = vmatpush1.bf16.msra.mxu0 %v291
    %312 = vmatprep.subr.bf16.mxu0 0
    %313 = vmatpush1.bf16.msra.mxu0 %v292
    %314 = vmatprep.subr.bf16.mxu0 0
    %315 = vmatpush1.bf16.msra.mxu0 %v293
    %316 = vmatprep.subr.bf16.mxu0 0
    %317 = vmatpush1.bf16.msra.mxu0 %v294
    %318 = vmatprep.subr.bf16.mxu0 0
    %319 = vmatpush1.bf16.msra.mxu0 %v295
    %320 = vmatprep.subr.bf16.mxu0 0
    %321 = vmatpush1.bf16.msra.mxu0 0
    %322 = vmatprep.subr.bf16.mxu0 0
    %323 = vmatpush1.bf16.msra.mxu0 0
    %324 = vmatprep.subr.bf16.mxu0 0
    %325 = vmatpush1.bf16.msra.mxu0 0
    %326 = vmatprep.subr.bf16.mxu0 0
    %327 = vmatpush1.bf16.msra.mxu0 0
    %328 = vmatprep.subr.bf16.mxu0 0
    %329 = vmatpush1.bf16.msra.mxu0 0
    %330 = vmatprep.subr.bf16.mxu0 0
    %331 = vmatpush1.bf16.msra.mxu0 0
    %332 = vmatprep.subr.bf16.mxu0 0
    %333 = vmatpush1.bf16.msra.mxu0 0
    %334 = vmatprep.subr.bf16.mxu0 0
    %335 = vmatpush1.bf16.msra.mxu0 0
    %336 = vmatprep.mubr.bf16.mxu0 0
    %337 = vmatmul.mubr.bf16.gmra.mrb[0].mxu0 %v232
    %v338 = vpop.f32.mrb[0].mxu0
    %v339 = vadd.f32 %v254, %v338
    %v340 = vpop.f32.mrb[0].mxu0
    %v341 = vpop.f32.mrb[0].mxu0
    %v342 = vadd.f32 %v254, %v341
    %v343 = vpop.f32.mrb[0].mxu0
    %344 = vdwg.mxu0
    %vm345 = vcmask 15360
    %346 = vst.msk [vmem:[%s7] sm:$0xff] %vm345, %v339
    %347 = vst.msk [vmem:[%s7 + $0x8] sm:$0xff] %vm345, %v342
    // Predicated region
    $region38: #{tpu_custom_call.1} parent=1 // pred_check
      _
    $region39: #{tpu_custom_call.1} parent=1 // pred_check_branch
      %349 = sbr.rel (0) target = $region41
    $region40: #{tpu_custom_call.1} parent=1 // pred_region
      _
    $region41: #{tpu_custom_call.1} parent=1 // pred_fallthru
      _
    // Predicated region
    $region42: #{tpu_custom_call.1} parent=1 // pred_check
      _
    $region43: #{tpu_custom_call.1} parent=1 // pred_check_branch
      %351 = sbr.rel (0) target = $region45
    $region44: #{tpu_custom_call.1} parent=1 // pred_region
      _
    $region45: #{tpu_custom_call.1} parent=1 // pred_fallthru
      _
    %352 = vsyncpa [#allocation3], 1
    %353 = vsyncpa [#allocation5], 1

</llo_original>
